<compile_context>
chip_gen: v7x
topology: tpu7x:2x2x1
jax: 0.10.0
libtpu: 0.0.40
codegen_flags: <defaults>
</compile_context>

<pallas_src>
import functools

import jax
import jax.numpy as jnp
from jax.experimental import pallas as pl
from jax.experimental.pallas import tpu as pltpu


def _round_up(x, m):
    return ((x + m - 1) // m) * m


def _pick_tm(n, d, itemsize, row_tile_bytes):
    """Row tile: ~row_tile_bytes of x per step, multiple of 8, >= 2 grid steps."""
    if n <= 8:
        return n
    tm = row_tile_bytes // max(1, d * itemsize)
    tm = max(8, min(4096, (tm // 8) * 8))
    half = _round_up(pl.cdiv(n, 2), 8)  # keep both v7x TensorCores fed
    return max(8, min(tm, half))


def _pick_tn(d, w_itemsize, weight_budget_bytes):
    """Output-feature tile: full residency when both weights fit VMEM budget,
    else the largest multiple-of-128 divisor of D that fits."""
    if d % 128 != 0:
        return d  # keep lane math / stores simple for odd D (correct, just slower)
    if 2 * d * d * w_itemsize <= weight_budget_bytes:
        return d  # both weights VMEM-resident
    best = 128
    for cand in range(128, d, 128):
        if d % cand == 0 and 2 * d * cand * w_itemsize <= weight_budget_bytes:
            best = cand
    return best


def _highway_kernel(x_ref, wp_ref, wg_ref, bp_ref, bg_ref, o_ref, *, tn, matmul_dtype):
    d = x_ref.shape[1]
    x = x_ref[...]                                           # (tm, D), native dtype
    xd = x if matmul_dtype is None else x.astype(matmul_dtype)

    # proj / gate pre-activations, f32 accumulation on the MXU.
    zp = jnp.dot(xd, wp_ref[...], preferred_element_type=jnp.float32) + bp_ref[...]
    zg = jnp.dot(xd, wg_ref[...], preferred_element_type=jnp.float32) + bg_ref[...]

    x_proj = jnp.maximum(zp, 0.0)                            # relu
    # logsigmoid(z) = -softplus(-z), numerically stable form
    x_gate = -(jnp.maximum(-zg, 0.0) + jnp.log1p(jnp.exp(-jnp.abs(zg))))

    # residual columns matching this output tile
    if tn == d:
        x_res = x
    else:
        col0 = pl.multiple_of(pl.program_id(1) * tn, tn)
        x_res = x_ref[:, pl.ds(col0, tn)]
    x_res = x_res.astype(jnp.float32)

    # highway mix: g*p + (1-g)*x  ==  x + g*(p - x)
    o_ref[...] = (x_res + x_gate * (x_proj - x_res)).astype(o_ref.dtype)


def highway(x, w_proj, b_proj, w_gate, b_gate, *,
            use_bf16_matmul=False, row_tile_bytes=2 << 20):
    """y = g * relu(x@Wp+bp) + (1 - g) * x, g = logsigmoid(x@Wg+bg).

    Weights are pre-transposed to (D_in, D_out): y = x @ W + b.
    """
    n, d = x.shape
    assert w_proj.shape == (d, d) and w_gate.shape == (d, d)
    assert b_proj.shape == (d,) and b_gate.shape == (d,)

    # VMEM limit with headroom (v7x: 64 MiB/TC -> 48 MiB; v5e/v6e: 128 -> 96 MiB).
    try:
        vmem_cap = int(getattr(pltpu.get_tpu_info(), "vmem_capacity_bytes", 64 << 20))
    except Exception:
        vmem_cap = 64 << 20  # conservative fallback
    vmem_limit = (vmem_cap * 3) // 4

    # Optional bf16 operand streaming (halves weight HBM traffic, 1 MXU pass).
    to_bf16 = bool(use_bf16_matmul) and x.dtype == jnp.float32
    w_dtype = jnp.bfloat16 if to_bf16 else w_proj.dtype
    matmul_dtype = jnp.bfloat16 if to_bf16 else None
    wp = w_proj.astype(w_dtype)
    wg = w_gate.astype(w_dtype)
    bp = b_proj.astype(jnp.float32).reshape(1, d)
    bg = b_gate.astype(jnp.float32).reshape(1, d)

    tm = _pick_tm(n, d, x.dtype.itemsize, row_tile_bytes)
    n_row = pl.cdiv(n, tm)
    tn = _pick_tn(d, wp.dtype.itemsize, vmem_limit // 2)
    n_col = max(1, d // tn)
    resident_w = n_col == 1

    def w_spec():
        if resident_w:  # constant index -> fetched once; single-buffer halves VMEM
            return pl.BlockSpec((d, tn), lambda i, j: (0, j),
                                pipeline_mode=pl.Buffered(1))
        return pl.BlockSpec((d, tn), lambda i, j: (0, j))

    w_stream = 2 * d * d * wp.dtype.itemsize * (1 if resident_w else n_row)
    cost = pl.CostEstimate(
        flops=2 * n * d * (2 * d),
        transcendentals=2 * n * d,                      # exp + log1p in logsigmoid
        bytes_accessed=2 * n * d * x.dtype.itemsize + w_stream + 2 * d * 4,
    )

    return pl.pallas_call(
        functools.partial(_highway_kernel, tn=tn, matmul_dtype=matmul_dtype),
        out_shape=jax.ShapeDtypeStruct((n, d), x.dtype),
        grid_spec=pltpu.PrefetchScalarGridSpec(
            num_scalar_prefetch=0,
            grid=(n_row, n_col),
            in_specs=[
                pl.BlockSpec((tm, d), lambda i, j: (i, 0)),      # x rows stream
                w_spec(),                                        # W_proj
                w_spec(),                                        # W_gate
                pl.BlockSpec((1, tn), lambda i, j: (0, j)),      # b_proj (f32)
                pl.BlockSpec((1, tn), lambda i, j: (0, j)),      # b_gate (f32)
            ],
            out_specs=pl.BlockSpec((tm, tn), lambda i, j: (i, j)),
        ),
        compiler_params=pltpu.CompilerParams(
            dimension_semantics=("parallel", "parallel"),
            vmem_limit_bytes=vmem_limit,
        ),
        cost_estimate=cost,
    )(x, wp, wg, bp, bg)


def highway_ref(x, w_proj, b_proj, w_gate, b_gate):
    x32 = x.astype(jnp.float32)
    x_proj = jax.nn.relu(x32 @ w_proj.astype(jnp.float32) + b_proj)
    x_gate = jax.nn.log_sigmoid(x32 @ w_gate.astype(jnp.float32) + b_gate)
    return (x_gate * x_proj + (1.0 - x_gate) * x32).astype(x.dtype)


if __name__ == "__main__":
    key = jax.random.PRNGKey(0)
    d = 128  # in_features == out_features (required by the residual mix)

    k_x, k_wp, k_bp, k_wg, k_bg = jax.random.split(key, 5)
    bound = 1.0 / jnp.sqrt(d)  # mimic PyTorch nn.Linear uniform init
    w_proj = jax.random.uniform(k_wp, (d, d), jnp.float32, -bound, bound)
    b_proj = jax.random.uniform(k_bp, (d,), jnp.float32, -bound, bound)
    w_gate = jax.random.uniform(k_wg, (d, d), jnp.float32, -bound, bound)
    b_gate = jax.random.uniform(k_bg, (d,), jnp.float32, -bound, bound)

    ok = True
    for n in (16, 20):  # exact and ragged-last-row-tile cases
        x = jax.random.normal(jax.random.fold_in(k_x, n), (n, d), dtype=jnp.float32)
        out = jax.block_until_ready(highway(x, w_proj, b_proj, w_gate, b_gate))
        ref = highway_ref(x, w_proj, b_proj, w_gate, b_gate)
        ok &= out.shape == (n, d)
        ok &= bool(jnp.allclose(out, ref, atol=1e-5, rtol=1e-5))
    assert ok, "mismatch vs reference"
    print("KERNEL_OK")
</pallas_src>

<mosaic_0001>
module attributes {stable_mosaic.version = 11 : i64} {
  func.func @_highway_kernel(%arg0: i32, %arg1: i32, %arg2: memref<8x128xf32, #tpu.memory_space<vmem>>, %arg3: memref<128x128xf32, #tpu.memory_space<vmem>>, %arg4: memref<128x128xf32, #tpu.memory_space<vmem>>, %arg5: memref<1x128xf32, #tpu.memory_space<vmem>>, %arg6: memref<1x128xf32, #tpu.memory_space<vmem>>, %arg7: memref<8x128xf32, #tpu.memory_space<vmem>>) attributes {dimension_semantics = [#tpu.dimension_semantics<parallel>, #tpu.dimension_semantics<parallel>], iteration_bounds = array<i64: 2, 1>, scalar_prefetch = 0 : i64, scratch_operands = 0 : i64, tpu.core_type = #tpu.core_type<tc>, window_params = [{transform_indices = @transform_0, window_bounds = array<i64: 8, 128>}, {pipeline_mode = #tpu.pipeline_mode<synchronous>, transform_indices = @transform_1, window_bounds = array<i64: 128, 128>}, {pipeline_mode = #tpu.pipeline_mode<synchronous>, transform_indices = @transform_2, window_bounds = array<i64: 128, 128>}, {transform_indices = @transform_3, window_bounds = array<i64: 1, 128>}, {transform_indices = @transform_4, window_bounds = array<i64: 1, 128>}, {transform_indices = @transform_5, window_bounds = array<i64: 8, 128>}]} {
    %c0 = arith.constant 0 : index
    %c0_0 = arith.constant 0 : index
    %0 = vector.load %arg2[%c0, %c0_0] : memref<8x128xf32, #tpu.memory_space<vmem>>, vector<8x128xf32>
    %c0_1 = arith.constant 0 : index
    %c0_2 = arith.constant 0 : index
    %1 = vector.load %arg3[%c0_1, %c0_2] : memref<128x128xf32, #tpu.memory_space<vmem>>, vector<128x128xf32>
    %cst = arith.constant dense<0.000000e+00> : vector<8x128xf32>
    %2 = tpu.matmul %0, %1, %cst {dimension_numbers = #tpu.dot_dimension_numbers<[1], [0], [0], [1], [0, 0, 1, 1], [], []>} : vector<8x128xf32>, vector<128x128xf32>, vector<8x128xf32> -> vector<8x128xf32>
    %c0_3 = arith.constant 0 : index
    %c0_4 = arith.constant 0 : index
    %3 = vector.load %arg5[%c0_3, %c0_4] : memref<1x128xf32, #tpu.memory_space<vmem>>, vector<1x128xf32>
    %4 = vector.broadcast %3 : vector<1x128xf32> to vector<8x128xf32>
    %5 = arith.addf %2, %4 : vector<8x128xf32>
    %c0_5 = arith.constant 0 : index
    %c0_6 = arith.constant 0 : index
    %6 = vector.load %arg4[%c0_5, %c0_6] : memref<128x128xf32, #tpu.memory_space<vmem>>, vector<128x128xf32>
    %cst_7 = arith.constant dense<0.000000e+00> : vector<8x128xf32>
    %7 = tpu.matmul %0, %6, %cst_7 {dimension_numbers = #tpu.dot_dimension_numbers<[1], [0], [0], [1], [0, 0, 1, 1], [], []>} : vector<8x128xf32>, vector<128x128xf32>, vector<8x128xf32> -> vector<8x128xf32>
    %c0_8 = arith.constant 0 : index
    %c0_9 = arith.constant 0 : index
    %8 = vector.load %arg6[%c0_8, %c0_9] : memref<1x128xf32, #tpu.memory_space<vmem>>, vector<1x128xf32>
    %9 = vector.broadcast %8 : vector<1x128xf32> to vector<8x128xf32>
    %10 = arith.addf %7, %9 : vector<8x128xf32>
    %cst_10 = arith.constant 0.000000e+00 : f32
    %11 = vector.broadcast %cst_10 : f32 to vector<8x128xf32>
    %12 = arith.maximumf %5, %11 : vector<8x128xf32>
    %cst_11 = arith.constant 0.000000e+00 : f32
    %13 = vector.broadcast %cst_11 : f32 to vector<8x128xf32>
    %14 = arith.subf %13, %10 : vector<8x128xf32>
    %cst_12 = arith.constant 0.000000e+00 : f32
    %15 = vector.broadcast %cst_12 : f32 to vector<8x128xf32>
    %16 = arith.maximumf %14, %15 : vector<8x128xf32>
    %17 = math.absf %10 : vector<8x128xf32>
    %cst_13 = arith.constant 0.000000e+00 : f32
    %18 = vector.broadcast %cst_13 : f32 to vector<8x128xf32>
    %19 = arith.subf %18, %17 : vector<8x128xf32>
    %20 = math.exp %19 : vector<8x128xf32>
    %21 = math.log1p %20 : vector<8x128xf32>
    %22 = arith.addf %16, %21 : vector<8x128xf32>
    %cst_14 = arith.constant 0.000000e+00 : f32
    %23 = vector.broadcast %cst_14 : f32 to vector<8x128xf32>
    %24 = arith.subf %23, %22 : vector<8x128xf32>
    %25 = arith.subf %12, %0 : vector<8x128xf32>
    %26 = arith.mulf %24, %25 : vector<8x128xf32>
    %27 = arith.addf %0, %26 : vector<8x128xf32>
    %c0_15 = arith.constant 0 : index
    %c0_16 = arith.constant 0 : index
    %28 = vector.load %arg7[%c0_15, %c0_16] : memref<8x128xf32, #tpu.memory_space<vmem>>, vector<8x128xf32>
    tpu.vector_store %arg7[%c0_15, %c0_16], %27 {strides = array<i32>} : memref<8x128xf32, #tpu.memory_space<vmem>>, vector<8x128xf32>,
    return
  }
  func.func @transform_0(%arg0: i32, %arg1: i32) -> (i32, i32) {
    %c0_i32 = arith.constant 0 : i32
    %c0_i32_0 = arith.constant 0 : i32
    return %arg0, %c0_i32 : i32, i32
  }
  func.func @transform_1(%arg0: i32, %arg1: i32) -> (i32, i32) {
    %c0_i32 = arith.constant 0 : i32
    %c0_i32_0 = arith.constant 0 : i32
    return %c0_i32, %arg1 : i32, i32
  }
  func.func @transform_2(%arg0: i32, %arg1: i32) -> (i32, i32) {
    %c0_i32 = arith.constant 0 : i32
    %c0_i32_0 = arith.constant 0 : i32
    return %c0_i32, %arg1 : i32, i32
  }
  func.func @transform_3(%arg0: i32, %arg1: i32) -> (i32, i32) {
    %c0_i32 = arith.constant 0 : i32
    %c0_i32_0 = arith.constant 0 : i32
    return %c0_i32, %arg1 : i32, i32
  }
  func.func @transform_4(%arg0: i32, %arg1: i32) -> (i32, i32) {
    %c0_i32 = arith.constant 0 : i32
    %c0_i32_0 = arith.constant 0 : i32
    return %c0_i32, %arg1 : i32, i32
  }
  func.func @transform_5(%arg0: i32, %arg1: i32) -> (i32, i32) {
    %c0_i32 = arith.constant 0 : i32
    return %arg0, %arg1 : i32, i32
  }
}

</mosaic_0001>

<llo_original>
// kernel: tpu_custom_call.1
$region0: #{tpu_custom_call.1}
  #allocation0 [shape = 'u32[]', space=smem, size = 0x4, offset = 0x4, fixed_abs, tag = 'smem constant byte address 0x4 - core index']
  #allocation1 [shape = 'u32[144,128]{1,0:T(1,128)}', space=vmem, size = 0x12000, scoped, tag = 'internal scratch']
  %s0 = inlined_call_operand.hbm [shape: f32[16,128], index: 0, kind: input, shape index: {}]
  %s1 = inlined_call_operand.hbm [shape: f32[128,128], index: 1, kind: input, shape index: {}]
  %s2 = inlined_call_operand.hbm [shape: f32[128,128], index: 2, kind: input, shape index: {}]
  %s3 = inlined_call_operand.vmem [shape: f32[1,128], index: 3, kind: input, shape index: {}]
  %s4 = inlined_call_operand.vmem [shape: f32[1,128], index: 4, kind: input, shape index: {}]
  %s5 = inlined_call_operand.hbm [shape: f32[16,128], index: 5, kind: output, shape index: {}]
  %s6 = sld [smem:[#allocation0]]
  $region65: #{tpu_custom_call.1} parent=0
    _
  %s8 = ssub.s32 1, %s6
  %s9 = scalar_select 0, %s8, %s6
  $region1: #{tpu_custom_call.1} parent=0
    #allocation2 [shape = 'u8[8192]{0}', space=vmem, size = 0x2000, scoped, tag = 'input window, operand 0']
    #allocation3 [shape = 's32[2]{0}', space=sflag, size = 0x8, scoped, tag = 'scoped memory for tpu_custom_call.1']
    #allocation4 [shape = 's32[2]{0}', space=sflag, size = 0x8, scoped, tag = 'scoped memory for tpu_custom_call.1']
    #allocation5 [shape = 'u8[65536]{0}', space=vmem, size = 0x10000, scoped, tag = 'input window, operand 1, single buffered']
    #allocation6 [shape = 's32[1]{0}', space=sflag, size = 0x4, scoped, tag = 'scoped memory for tpu_custom_call.1']
    #allocation7 [shape = 'u8[65536]{0}', space=vmem, size = 0x10000, scoped, tag = 'input window, operand 2, single buffered']
    #allocation8 [shape = 'u8[8192]{0}', space=vmem, size = 0x2000, scoped, tag = 'output window, operand 0']
    %10 = vsyncpa [#allocation3], 0
    %s11 = scalar_lea.sflag [#allocation3], 1
    %12 = vsyncpa %s11, 0
    %13 = vsyncpa [#allocation6], 0
    %14 = vsyncpa [#allocation4], 0
    %s15 = scalar_lea.sflag [#allocation4], 1
    %16 = vsyncpa %s15, 0
    loop: start=0, step=1, limit=4
    $region2: #{tpu_custom_call.1} parent=1 // loop_pre_header
      _
    $region3: #{tpu_custom_call.1} parent=1 // loop_header
      %s18 = sphi 0, %s22
      %p19 = scmp.ge.s32.totalorder %s18, 4
      %s25 = sphi 0, %s37
      %s26 = sphi 0, %s33
      %s27 = sphi 0, %s25
      %s28 = sphi 0, %s26
      %s29 = sphi 0, %s27
      %s30 = sphi 0, %s28
      %s40 = sphi 0, %s42
      %s43 = sphi 0, %s40
      %s44 = sphi 0, %s43
      %s60 = sphi 0, %s44
      %s66 = sphi 0, %s68
      %s69 = sphi 0, %s66
      %s70 = sphi 0, %s69
      %s86 = sphi 0, %s70
      %s92 = sphi 0, %s94
      %s95 = sphi 0, %s92
      %s96 = sphi 0, %s95
      %s112 = sphi 0, %s96
      %s118 = sphi 0, %s120
      %s121 = sphi 0, %s118
      %s122 = sphi 0, %s121
      %s138 = sphi 0, %s122
      %s144 = sphi 0, %s146
      %s147 = sphi 0, %s144
      %s148 = sphi 0, %s147
      %s164 = sphi 0, %s148
      %s172 = sphi 0, %s174
      %s175 = sphi 0, %s172
      %s176 = sphi 0, %s175
      %s192 = sphi 0, %s176
    $region4: #{tpu_custom_call.1} parent=1 // loop_header_branch
      %21 = sbr.rel (%p19) target = $region8
    $region5: #{tpu_custom_call.1} parent=1 // loop_body
      %s23 = ssub.s32 %s18, 1
      %s24 = ssub.s32 %s18, 2
      %s31 = sadd.s32 1, %s26
      %p32 = scmp.ge.s32.totalorder %s31, 1
      %s33 = scalar_select %p32, 0, %s31
      %s34 = sadd.s32 1, %s25
      %s35 = scalar_select %p32, %s34, %s25
      %p36 = scmp.ge.s32.totalorder %s35, 2
      %s37 = scalar_select %p36, 0, %s35
      %s38 = ssub.s32 %s25, %s37
      %p39 = scmp.eq.s32.totalorder %s38, 0
      %s41 = sadd.s32 %s40, 1
      %s42 = scalar_select %p39, %s40, %s41
      %p45 = pneg %p39
      %p46 = scmp.eq.s32.totalorder %s18, 1
      %p47 = por %p45, %p46
      %p48 = scmp.ne.s32.totalorder %s40, %s43
      %p49 = scmp.eq.s32.totalorder %s18, 0
      %p50 = por %p48, %p49
      %p51 = scmp.ne.s32.totalorder %s40, %s43
      %p52 = scmp.eq.s32.totalorder %s23, 1
      %p53 = por %p51, %p52
      %p54 = scmp.ne.s32.totalorder %s43, %s44
      %p55 = scmp.eq.s32.totalorder %s23, 0
      %p56 = por %p54, %p55
      %p57 = scmp.ne.s32.totalorder %s43, %s44
      %p58 = scmp.eq.s32.totalorder %s24, 1
      %p59 = por %p57, %p58
      %p61 = scmp.ne.s32.totalorder %s44, %s60
      %p62 = scmp.eq.s32.totalorder %s24, 0
      %p63 = por %p61, %p62
      %s64 = ssub.s32 %s26, %s33
      %p65 = scmp.eq.s32.totalorder %s64, 0
      %s67 = sadd.s32 %s66, 1
      %s68 = scalar_select %p65, %s66, %s67
      %p71 = pneg %p65
      %p72 = scmp.eq.s32.totalorder %s18, 1
      %p73 = por %p71, %p72
      %p74 = scmp.ne.s32.totalorder %s66, %s69
      %p75 = scmp.eq.s32.totalorder %s18, 0
      %p76 = por %p74, %p75
      %p77 = scmp.ne.s32.totalorder %s66, %s69
      %p78 = scmp.eq.s32.totalorder %s23, 1
      %p79 = por %p77, %p78
      %p80 = scmp.ne.s32.totalorder %s69, %s70
      %p81 = scmp.eq.s32.totalorder %s23, 0
      %p82 = por %p80, %p81
      %p83 = scmp.ne.s32.totalorder %s69, %s70
      %p84 = scmp.eq.s32.totalorder %s24, 1
      %p85 = por %p83, %p84
      %p87 = scmp.ne.s32.totalorder %s70, %s86
      %p88 = scmp.eq.s32.totalorder %s24, 0
      %p89 = por %p87, %p88
      %s90 = ssub.s32 %s26, %s33
      %p91 = scmp.eq.s32.totalorder %s90, 0
      %s93 = sadd.s32 %s92, 1
      %s94 = scalar_select %p91, %s92, %s93
      %p97 = pneg %p91
      %p98 = scmp.eq.s32.totalorder %s18, 1
      %p99 = por %p97, %p98
      %p100 = scmp.ne.s32.totalorder %s92, %s95
      %p101 = scmp.eq.s32.totalorder %s18, 0
      %p102 = por %p100, %p101
      %p103 = scmp.ne.s32.totalorder %s92, %s95
      %p104 = scmp.eq.s32.totalorder %s23, 1
      %p105 = por %p103, %p104
      %p106 = scmp.ne.s32.totalorder %s95, %s96
      %p107 = scmp.eq.s32.totalorder %s23, 0
      %p108 = por %p106, %p107
      %p109 = scmp.ne.s32.totalorder %s95, %s96
      %p110 = scmp.eq.s32.totalorder %s24, 1
      %p111 = por %p109, %p110
      %p113 = scmp.ne.s32.totalorder %s96, %s112
      %p114 = scmp.eq.s32.totalorder %s24, 0
      %p115 = por %p113, %p114
      %s116 = ssub.s32 %s26, %s33
      %p117 = scmp.eq.s32.totalorder %s116, 0
      %s119 = sadd.s32 %s118, 1
      %s120 = scalar_select %p117, %s118, %s119
      %p123 = pneg %p117
      %p124 = scmp.eq.s32.totalorder %s18, 1
      %p125 = por %p123, %p124
      %p126 = scmp.ne.s32.totalorder %s118, %s121
      %p127 = scmp.eq.s32.totalorder %s18, 0
      %p128 = por %p126, %p127
      %p129 = scmp.ne.s32.totalorder %s118, %s121
      %p130 = scmp.eq.s32.totalorder %s23, 1
      %p131 = por %p129, %p130
      %p132 = scmp.ne.s32.totalorder %s121, %s122
      %p133 = scmp.eq.s32.totalorder %s23, 0
      %p134 = por %p132, %p133
      %p135 = scmp.ne.s32.totalorder %s121, %s122
      %p136 = scmp.eq.s32.totalorder %s24, 1
      %p137 = por %p135, %p136
      %p139 = scmp.ne.s32.totalorder %s122, %s138
      %p140 = scmp.eq.s32.totalorder %s24, 0
      %p141 = por %p139, %p140
      %s142 = ssub.s32 %s26, %s33
      %p143 = scmp.eq.s32.totalorder %s142, 0
      %s145 = sadd.s32 %s144, 1
      %s146 = scalar_select %p143, %s144, %s145
      %p149 = pneg %p143
      %p150 = scmp.eq.s32.totalorder %s18, 1
      %p151 = por %p149, %p150
      %p152 = scmp.ne.s32.totalorder %s144, %s147
      %p153 = scmp.eq.s32.totalorder %s18, 0
      %p154 = por %p152, %p153
      %p155 = scmp.ne.s32.totalorder %s144, %s147
      %p156 = scmp.eq.s32.totalorder %s23, 1
      %p157 = por %p155, %p156
      %p158 = scmp.ne.s32.totalorder %s147, %s148
      %p159 = scmp.eq.s32.totalorder %s23, 0
      %p160 = por %p158, %p159
      %p161 = scmp.ne.s32.totalorder %s147, %s148
      %p162 = scmp.eq.s32.totalorder %s24, 1
      %p163 = por %p161, %p162
      %p165 = scmp.ne.s32.totalorder %s148, %s164
      %p166 = scmp.eq.s32.totalorder %s24, 0
      %p167 = por %p165, %p166
      %s168 = ssub.s32 %s25, %s37
      %s169 = ssub.s32 %s26, %s33
      %s170 = sor.u32 %s168, %s169
      %p171 = scmp.eq.s32.totalorder %s170, 0
      %s173 = sadd.s32 %s172, 1
      %s174 = scalar_select %p171, %s172, %s173
      %p177 = pneg %p171
      %p178 = scmp.eq.s32.totalorder %s18, 1
      %p179 = por %p177, %p178
      %p180 = scmp.ne.s32.totalorder %s172, %s175
      %p181 = scmp.eq.s32.totalorder %s18, 0
      %p182 = por %p180, %p181
      %p183 = scmp.ne.s32.totalorder %s172, %s175
      %p184 = scmp.eq.s32.totalorder %s23, 1
      %p185 = por %p183, %p184
      %p186 = scmp.ne.s32.totalorder %s175, %s176
      %p187 = scmp.eq.s32.totalorder %s23, 0
      %p188 = por %p186, %p187
      %p189 = scmp.ne.s32.totalorder %s175, %s176
      %p190 = scmp.eq.s32.totalorder %s24, 1
      %p191 = por %p189, %p190
      %p193 = scmp.ne.s32.totalorder %s176, %s192
      %p194 = scmp.eq.s32.totalorder %s24, 0
      %p195 = por %p193, %p194
      %p196 = scmp.le.s32.totalorder 1, %s18
      %p197 = scmp.lt.s32.totalorder %s18, 3
      %p198 = pnand %p196, %p197
      %p199 = pneg %p198
      // Predicated region
      $region9: #{tpu_custom_call.1} parent=5 // pred_check
        _
      $region10: #{tpu_custom_call.1} parent=5 // pred_check_branch
        %201 = sbr.rel (%p198) target = $region12
      $region11: #{tpu_custom_call.1} parent=5 // pred_region
        %s202 = ssub.s32 %s18, 1
        // Predicated region
        $region13: #{tpu_custom_call.1} parent=11 // pred_check
          %p203 = pneg %p82
        $region14: #{tpu_custom_call.1} parent=11 // pred_check_branch
          %205 = sbr.rel (%p203) target = $region16
        $region15: #{tpu_custom_call.1} parent=11 // pred_region
          %s207 = ssub.s32 2048, 2048
          %208 = vsyncadd [#allocation6], %s207
          %s209 = smul.addr %s28, 128
          %s210 = scalar_lea.hbm %s1, %s209
          %s211 = sshll.u32 [#allocation5], 4
          %s212 = int_to_ptr.vmem [resolvable:$true] %s211
          %217 = dma.hbm_to_vmem [thread:$0]  %s210, 2048, %s212, [#allocation6], 128, 128, 8
        $region16: #{tpu_custom_call.1} parent=11 // pred_fallthru
          _
        // Predicated region
        $region17: #{tpu_custom_call.1} parent=11 // pred_check
          %p218 = pneg %p108
        $region18: #{tpu_custom_call.1} parent=11 // pred_check_branch
          %220 = sbr.rel (%p218) target = $region20
        $region19: #{tpu_custom_call.1} parent=11 // pred_region
          %s222 = ssub.s32 2048, 2048
          %223 = vsyncadd [#allocation6], %s222
          %s224 = smul.addr %s28, 128
          %s225 = scalar_lea.hbm %s2, %s224
          %s226 = sshll.u32 [#allocation7], 4
          %s227 = int_to_ptr.vmem [resolvable:$true] %s226
          %232 = dma.hbm_to_vmem [thread:$0]  %s225, 2048, %s227, [#allocation6], 128, 128, 8
        $region20: #{tpu_custom_call.1} parent=11 // pred_fallthru
          _
        // Predicated region
        $region21: #{tpu_custom_call.1} parent=11 // pred_check
          %p233 = pneg %p134
        $region22: #{tpu_custom_call.1} parent=11 // pred_check_branch
          %235 = sbr.rel (%p233) target = $region24
        $region23: #{tpu_custom_call.1} parent=11 // pred_region
          %p236 = scmp.lt.s32.totalorder %s28, 0
          %s237 = scalar_select %p236, %s28, 0
          %s238 = scalar_lea.vmem %s3, %s237
        $region24: #{tpu_custom_call.1} parent=11 // pred_fallthru
          _
        // Predicated region
        $region25: #{tpu_custom_call.1} parent=11 // pred_check
          %p239 = pneg %p160
        $region26: #{tpu_custom_call.1} parent=11 // pred_check_branch
          %241 = sbr.rel (%p239) target = $region28
        $region27: #{tpu_custom_call.1} parent=11 // pred_region
          %p242 = scmp.lt.s32.totalorder %s28, 0
          %s243 = scalar_select %p242, %s28, 0
          %s244 = scalar_lea.vmem %s4, %s243
        $region28: #{tpu_custom_call.1} parent=11 // pred_fallthru
          _
      $region12: #{tpu_custom_call.1} parent=5 // pred_fallthru
        _
      %p245 = scmp.lt.s32.totalorder %s18, 2
      // Predicated region
      $region29: #{tpu_custom_call.1} parent=5 // pred_check
        %p246 = pneg %p245
      $region30: #{tpu_custom_call.1} parent=5 // pred_check_branch
        %248 = sbr.rel (%p246) target = $region32
      $region31: #{tpu_custom_call.1} parent=5 // pred_region
        // Predicated region
        $region33: #{tpu_custom_call.1} parent=31 // pred_check
          %p249 = pneg %p50
        $region34: #{tpu_custom_call.1} parent=31 // pred_check_branch
          %251 = sbr.rel (%p249) target = $region36
        $region35: #{tpu_custom_call.1} parent=31 // pred_region
          %s252 = sand.u32 %s40, 1
          %s253 = scalar_lea.sflag [#allocation3], %s252
          %s254 = sand.u32 %s40, 1
          %s255 = smul.addr %s254, 8
          %s256 = scalar_lea.vmem [#allocation2], %s255
          %s258 = ssub.s32 128, 128
          %259 = vsyncadd %s253, %s258
          %s260 = smul.addr %s25, 128
          %s261 = scalar_lea.hbm %s0, %s260
          %s263 = sshll.u32 %s256, 4
          %s264 = int_to_ptr.vmem [resolvable:$true] %s263
          %266 = dma.hbm_to_vmem [thread:$0]  %s261, 128, %s264, %s253
        $region36: #{tpu_custom_call.1} parent=31 // pred_fallthru
          _
      $region32: #{tpu_custom_call.1} parent=5 // pred_fallthru
        _
      %p267 = scmp.le.s32.totalorder 1, %s18
      %p268 = scmp.lt.s32.totalorder %s18, 3
      %p269 = pnand %p267, %p268
      %p270 = pneg %p269
      // Predicated region
      $region37: #{tpu_custom_call.1} parent=5 // pred_check
        _
      $region38: #{tpu_custom_call.1} parent=5 // pred_check_branch
        %272 = sbr.rel (%p269) target = $region40
      $region39: #{tpu_custom_call.1} parent=5 // pred_region
        %s273 = ssub.s32 %s18, 1
        %s274 = sand.u32 %s43, 1
        %s275 = scalar_lea.sflag [#allocation3], %s274
        %s276 = sand.u32 %s43, 1
        %s277 = smul.addr %s276, 8
        %s278 = scalar_lea.vmem [#allocation2], %s277
        // Predicated region
        $region41: #{tpu_custom_call.1} parent=39 // pred_check
          %p279 = pneg %p56
        $region42: #{tpu_custom_call.1} parent=39 // pred_check_branch
          %281 = sbr.rel (%p279) target = $region44
        $region43: #{tpu_custom_call.1} parent=39 // pred_region
          %282 = dma.done %s275, 128
        $region44: #{tpu_custom_call.1} parent=39 // pred_fallthru
          _
        // Predicated region
        $region45: #{tpu_custom_call.1} parent=39 // pred_check
          %p283 = pneg %p82
        $region46: #{tpu_custom_call.1} parent=39 // pred_check_branch
          %285 = sbr.rel (%p283) target = $region48
        $region47: #{tpu_custom_call.1} parent=39 // pred_region
          %286 = dma.done [#allocation6], 2048
        $region48: #{tpu_custom_call.1} parent=39 // pred_fallthru
          _
        // Predicated region
        $region49: #{tpu_custom_call.1} parent=39 // pred_check
          %p287 = pneg %p108
        $region50: #{tpu_custom_call.1} parent=39 // pred_check_branch
          %289 = sbr.rel (%p287) target = $region52
        $region51: #{tpu_custom_call.1} parent=39 // pred_region
          %290 = dma.done [#allocation6], 2048
        $region52: #{tpu_custom_call.1} parent=39 // pred_fallthru
          _
        %s291 = sand.u32 %s43, 1
        %s292 = scalar_lea.sflag [#allocation3], %s291
        %s293 = sand.u32 %s43, 1
        %s294 = smul.addr %s293, 8
        %s295 = scalar_lea.vmem [#allocation2], %s294
        %p296 = pneg %p56
        %p297 = pneg %p53
        %p298 = pneg %p82
        %p299 = pneg %p79
        %p300 = pneg %p108
        %p301 = pneg %p105
        %p302 = scmp.lt.s32.totalorder %s28, 0
        %s303 = scalar_select %p302, %s28, 0
        %s304 = scalar_lea.vmem %s3, %s303
        %p305 = pneg %p134
        %p306 = pneg %p131
        %p307 = scmp.lt.s32.totalorder %s28, 0
        %s308 = scalar_select %p307, %s28, 0
        %s309 = scalar_lea.vmem %s4, %s308
        %p310 = pneg %p160
        %p311 = pneg %p157
        %p312 = pneg %p188
        %p313 = pneg %p185
        %s314 = sand.u32 %s175, 1
        %s315 = scalar_lea.sflag [#allocation4], %s314
        %s316 = sand.u32 %s175, 1
        %s317 = smul.addr %s316, 8
        %s318 = scalar_lea.vmem [#allocation8], %s317
        %p319 = scmp.lt.s32.totalorder %s28, 0
        %s320 = scalar_select %p319, %s28, 0
        %s321 = scalar_lea.vmem %s3, %s320
        %p322 = scmp.lt.s32.totalorder %s28, 0
        %s323 = scalar_select %p322, %s28, 0
        %s324 = scalar_lea.vmem %s4, %s323
        %v325 = vld [vmem:[%s278] sm:$0xff]
        %v326 = vld [vmem:[#allocation5] sm:$0xff]
        %v327 = vld [vmem:[#allocation5 + $0x8] sm:$0xff]
        %v328 = vld [vmem:[#allocation5 + $0x10] sm:$0xff]
        %v329 = vld [vmem:[#allocation5 + $0x18] sm:$0xff]
        %v330 = vld [vmem:[#allocation5 + $0x20] sm:$0xff]
        %v331 = vld [vmem:[#allocation5 + $0x28] sm:$0xff]
        %v332 = vld [vmem:[#allocation5 + $0x30] sm:$0xff]
        %v333 = vld [vmem:[#allocation5 + $0x38] sm:$0xff]
        %v334 = vld [vmem:[#allocation5 + $0x40] sm:$0xff]
        %v335 = vld [vmem:[#allocation5 + $0x48] sm:$0xff]
        %v336 = vld [vmem:[#allocation5 + $0x50] sm:$0xff]
        %v337 = vld [vmem:[#allocation5 + $0x58] sm:$0xff]
        %v338 = vld [vmem:[#allocation5 + $0x60] sm:$0xff]
        %v339 = vld [vmem:[#allocation5 + $0x68] sm:$0xff]
        %v340 = vld [vmem:[#allocation5 + $0x70] sm:$0xff]
        %v341 = vld [vmem:[#allocation5 + $0x78] sm:$0xff]
        %v342 = vld [vmem:[%s321] sm:$0x1]
        %v344 = vlaneseq
        %v345 = vshrl.u32 %v344, 7
        %v346 = vsub.s32 0, %v345
        %v347 = vrot.slane %v342, %v346
        %349 = vmatprep.subr.mxu0 0.0
        %350 = vmatpush1.msra.mxu0 %v326
        %351 = vmatprep.subr.mxu0 0.0
        %352 = vmatpush1.msra.mxu0 %v327
        %353 = vmatprep.subr.mxu0 0.0
        %354 = vmatpush1.msra.mxu0 %v328
        %355 = vmatprep.subr.mxu0 0.0
        %356 = vmatpush1.msra.mxu0 %v329
        %357 = vmatprep.subr.mxu0 0.0
        %358 = vmatpush1.msra.mxu0 %v330
        %359 = vmatprep.subr.mxu0 0.0
        %360 = vmatpush1.msra.mxu0 %v331
        %361 = vmatprep.subr.mxu0 0.0
        %362 = vmatpush1.msra.mxu0 %v332
        %363 = vmatprep.subr.mxu0 0.0
        %364 = vmatpush1.msra.mxu0 %v333
        %365 = vmatprep.subr.mxu0 0.0
        %366 = vmatpush1.msra.mxu0 %v334
        %367 = vmatprep.subr.mxu0 0.0
        %368 = vmatpush1.msra.mxu0 %v335
        %369 = vmatprep.subr.mxu0 0.0
        %370 = vmatpush1.msra.mxu0 %v336
        %371 = vmatprep.subr.mxu0 0.0
        %372 = vmatpush1.msra.mxu0 %v337
        %373 = vmatprep.subr.mxu0 0.0
        %374 = vmatpush1.msra.mxu0 %v338
        %375 = vmatprep.subr.mxu0 0.0
        %376 = vmatpush1.msra.mxu0 %v339
        %377 = vmatprep.subr.mxu0 0.0
        %378 = vmatpush1.msra.mxu0 %v340
        %379 = vmatprep.subr.mxu0 0.0
        %380 = vmatpush1.msra.mxu0 %v341
        %381 = vmatprep.subr.mxu0 0.0
        %382 = vmatpush1.msra.mxu0 0.0
        %383 = vmatprep.subr.mxu0 0.0
        %384 = vmatpush1.msra.mxu0 0.0
        %385 = vmatprep.subr.mxu0 0.0
        %386 = vmatpush1.msra.mxu0 0.0
        %387 = vmatprep.subr.mxu0 0.0
        %388 = vmatpush1.msra.mxu0 0.0
        %389 = vmatprep.subr.mxu0 0.0
        %390 = vmatpush1.msra.mxu0 0.0
        %391 = vmatprep.subr.mxu0 0.0
        %392 = vmatpush1.msra.mxu0 0.0
        %393 = vmatprep.subr.mxu0 0.0
        %394 = vmatpush1.msra.mxu0 0.0
        %395 = vmatprep.subr.mxu0 0.0
        %396 = vmatpush1.msra.mxu0 0.0
        %397 = vmatprep.subr.mxu0 0.0
        %398 = vmatpush1.msra.mxu0 0.0
        %399 = vmatprep.subr.mxu0 0.0
        %400 = vmatpush1.msra.mxu0 0.0
        %401 = vmatprep.subr.mxu0 0.0
        %402 = vmatpush1.msra.mxu0 0.0
        %403 = vmatprep.subr.mxu0 0.0
        %404 = vmatpush1.msra.mxu0 0.0
        %405 = vmatprep.subr.mxu0 0.0
        %406 = vmatpush1.msra.mxu0 0.0
        %407 = vmatprep.subr.mxu0 0.0
        %408 = vmatpush1.msra.mxu0 0.0
        %409 = vmatprep.subr.mxu0 0.0
        %410 = vmatpush1.msra.mxu0 0.0
        %411 = vmatprep.subr.mxu0 0.0
        %412 = vmatpush1.msra.mxu0 0.0
        %413 = vmatprep.mubr.f32.mxu0 0.0
        %414 = vmatmul.mubr.f32.gmra.mrb[0].mxu0 %v325
        %v415 = vpop.f32.mrb[0].mxu0
        %v416 = vadd.f32 %v347, %v415
        %v417 = vpop.f32.mrb[0].mxu0
        %418 = vdwg.mxu0
        %v419 = vld [vmem:[#allocation7] sm:$0xff]
        %v420 = vld [vmem:[#allocation7 + $0x8] sm:$0xff]
        %v421 = vld [vmem:[#allocation7 + $0x10] sm:$0xff]
        %v422 = vld [vmem:[#allocation7 + $0x18] sm:$0xff]
        %v423 = vld [vmem:[#allocation7 + $0x20] sm:$0xff]
        %v424 = vld [vmem:[#allocation7 + $0x28] sm:$0xff]
        %v425 = vld [vmem:[#allocation7 + $0x30] sm:$0xff]
        %v426 = vld [vmem:[#allocation7 + $0x38] sm:$0xff]
        %v427 = vld [vmem:[#allocation7 + $0x40] sm:$0xff]
        %v428 = vld [vmem:[#allocation7 + $0x48] sm:$0xff]
        %v429 = vld [vmem:[#allocation7 + $0x50] sm:$0xff]
        %v430 = vld [vmem:[#allocation7 + $0x58] sm:$0xff]
        %v431 = vld [vmem:[#allocation7 + $0x60] sm:$0xff]
        %v432 = vld [vmem:[#allocation7 + $0x68] sm:$0xff]
        %v433 = vld [vmem:[#allocation7 + $0x70] sm:$0xff]
        %v434 = vld [vmem:[#allocation7 + $0x78] sm:$0xff]
        %v435 = vld [vmem:[%s324] sm:$0x1]
        %v437 = vlaneseq
        %v438 = vshrl.u32 %v437, 7
        %v439 = vsub.s32 0, %v438
        %v440 = vrot.slane %v435, %v439
        %442 = vmatprep.subr.mxu0 0.0
        %443 = vmatpush1.msra.mxu0 %v419
        %444 = vmatprep.subr.mxu0 0.0
        %445 = vmatpush1.msra.mxu0 %v420
        %446 = vmatprep.subr.mxu0 0.0
        %447 = vmatpush1.msra.mxu0 %v421
        %448 = vmatprep.subr.mxu0 0.0
        %449 = vmatpush1.msra.mxu0 %v422
        %450 = vmatprep.subr.mxu0 0.0
        %451 = vmatpush1.msra.mxu0 %v423
        %452 = vmatprep.subr.mxu0 0.0
        %453 = vmatpush1.msra.mxu0 %v424
        %454 = vmatprep.subr.mxu0 0.0
        %455 = vmatpush1.msra.mxu0 %v425
        %456 = vmatprep.subr.mxu0 0.0
        %457 = vmatpush1.msra.mxu0 %v426
        %458 = vmatprep.subr.mxu0 0.0
        %459 = vmatpush1.msra.mxu0 %v427
        %460 = vmatprep.subr.mxu0 0.0
        %461 = vmatpush1.msra.mxu0 %v428
        %462 = vmatprep.subr.mxu0 0.0
        %463 = vmatpush1.msra.mxu0 %v429
        %464 = vmatprep.subr.mxu0 0.0
        %465 = vmatpush1.msra.mxu0 %v430
        %466 = vmatprep.subr.mxu0 0.0
        %467 = vmatpush1.msra.mxu0 %v431
        %468 = vmatprep.subr.mxu0 0.0
        %469 = vmatpush1.msra.mxu0 %v432
        %470 = vmatprep.subr.mxu0 0.0
        %471 = vmatpush1.msra.mxu0 %v433
        %472 = vmatprep.subr.mxu0 0.0
        %473 = vmatpush1.msra.mxu0 %v434
        %474 = vmatprep.subr.mxu0 0.0
        %475 = vmatpush1.msra.mxu0 0.0
        %476 = vmatprep.subr.mxu0 0.0
        %477 = vmatpush1.msra.mxu0 0.0
        %478 = vmatprep.subr.mxu0 0.0
        %479 = vmatpush1.msra.mxu0 0.0
        %480 = vmatprep.subr.mxu0 0.0
        %481 = vmatpush1.msra.mxu0 0.0
        %482 = vmatprep.subr.mxu0 0.0
        %483 = vmatpush1.msra.mxu0 0.0
        %484 = vmatprep.subr.mxu0 0.0
        %485 = vmatpush1.msra.mxu0 0.0
        %486 = vmatprep.subr.mxu0 0.0
        %487 = vmatpush1.msra.mxu0 0.0
        %488 = vmatprep.subr.mxu0 0.0
        %489 = vmatpush1.msra.mxu0 0.0
        %490 = vmatprep.subr.mxu0 0.0
        %491 = vmatpush1.msra.mxu0 0.0
        %492 = vmatprep.subr.mxu0 0.0
        %493 = vmatpush1.msra.mxu0 0.0
        %494 = vmatprep.subr.mxu0 0.0
        %495 = vmatpush1.msra.mxu0 0.0
        %496 = vmatprep.subr.mxu0 0.0
        %497 = vmatpush1.msra.mxu0 0.0
        %498 = vmatprep.subr.mxu0 0.0
        %499 = vmatpush1.msra.mxu0 0.0
        %500 = vmatprep.subr.mxu0 0.0
        %501 = vmatpush1.msra.mxu0 0.0
        %502 = vmatprep.subr.mxu0 0.0
        %503 = vmatpush1.msra.mxu0 0.0
        %504 = vmatprep.subr.mxu0 0.0
        %505 = vmatpush1.msra.mxu0 0.0
        %506 = vmatprep.mubr.f32.mxu0 0.0
        %507 = vmatmul.mubr.f32.gmra.mrb[0].mxu0 %v325
        %v508 = vpop.f32.mrb[0].mxu0
        %v509 = vadd.f32 %v440, %v508
        %v510 = vpop.f32.mrb[0].mxu0
        %511 = vdwg.mxu0
        %v512 = vmax.f32 %v416, 0.0
        %v513 = vsub.f32 0.0, %v509
        %v514 = vmax.f32 %v513, 0.0
        %v515 = vand.u32 2147483647, %v509
        %v516 = vsub.f32 0.0, %v515
        %v517 = vmul.f32 %v516, 1.442695
        %v518 = vpow.pop %v517
        %v519 = vadd.f32 %v518, 1.0
        %v520 = vlog2.pop %v519
        %v521 = vmul.f32 %v520, 0.6931472
        %v522 = vmul.f32 -0.5, %v518
        %v523 = vadd.f32 %v522, 1.0
        %v524 = vmul.f32 %v523, %v518
        %v525 = vand.u32 2147483647, %v518
        %vm526 = vcmp.lt.f32.partialorder %v525, 0.0004427343
        %v527 = vsel %vm526, %v524, %v521
        %v528 = vadd.f32 %v514, %v527
        %v529 = vsub.f32 0.0, %v528
        %v530 = vsub.f32 %v512, %v325
        %v531 = vmul.f32 %v529, %v530
        %v532 = vadd.f32 %v325, %v531
        %533 = vst [vmem:[%s318] sm:$0xff] %v532
        %s534 = sand.u32 %s175, 1
        %s535 = scalar_lea.sflag [#allocation4], %s534
        %s536 = sand.u32 %s175, 1
        %s537 = smul.addr %s536, 8
        %s538 = scalar_lea.vmem [#allocation8], %s537
        // Predicated region
        $region53: #{tpu_custom_call.1} parent=39 // pred_check
          %p539 = pneg %p185
        $region54: #{tpu_custom_call.1} parent=39 // pred_check_branch
          %541 = sbr.rel (%p539) target = $region56
        $region55: #{tpu_custom_call.1} parent=39 // pred_region
          %s543 = ssub.s32 128, 128
          %544 = vsyncadd %s535, %s543
          %s545 = sadd.s32 %s28, %s27
          %s546 = smul.addr %s545, 128
          %s547 = scalar_lea.hbm %s5, %s546
          %s549 = sshll.u32 %s538, 4
          %s550 = int_to_ptr.vmem [resolvable:$true] %s549
          %552 = dma.vmem_to_hbm [thread:$0]  %s550, 128, %s547, %s535
        $region56: #{tpu_custom_call.1} parent=39 // pred_fallthru
          _
      $region40: #{tpu_custom_call.1} parent=5 // pred_fallthru
        _
      %p553 = scmp.le.s32.totalorder 2, %s18
      // Predicated region
      $region57: #{tpu_custom_call.1} parent=5 // pred_check
        %p554 = pneg %p553
      $region58: #{tpu_custom_call.1} parent=5 // pred_check_branch
        %556 = sbr.rel (%p554) target = $region60
      $region59: #{tpu_custom_call.1} parent=5 // pred_region
        %s557 = ssub.s32 %s18, 2
        // Predicated region
        $region61: #{tpu_custom_call.1} parent=59 // pred_check
          %p558 = pneg %p191
        $region62: #{tpu_custom_call.1} parent=59 // pred_check_branch
          %560 = sbr.rel (%p558) target = $region64
        $region63: #{tpu_custom_call.1} parent=59 // pred_region
          %s561 = sand.u32 %s176, 1
          %s562 = scalar_lea.sflag [#allocation4], %s561
          %s563 = sand.u32 %s176, 1
          %s564 = smul.addr %s563, 8
          %s565 = scalar_lea.vmem [#allocation8], %s564
          %566 = dma.done %s562, 128
        $region64: #{tpu_custom_call.1} parent=59 // pred_fallthru
          _
      $region60: #{tpu_custom_call.1} parent=5 // pred_fallthru
        _
    $region6: #{tpu_custom_call.1} parent=1 // loop_footer
      %s22 = sadd.s32 1, %s18
    $region7: #{tpu_custom_call.1} parent=1 // loop_footer_branch
      %17 = sbr.rel target = $region3
    $region8: #{tpu_custom_call.1} parent=1 // loop_exit
      _
    %567 = vsyncpa [#allocation3], 1
    %s568 = scalar_lea.sflag [#allocation3], 1
    %569 = vsyncpa %s568, 1
    %570 = vsyncpa [#allocation6], 1
    %571 = vsyncpa [#allocation4], 1
    %s572 = scalar_lea.sflag [#allocation4], 1
    %573 = vsyncpa %s572, 1

</llo_original>
